<compile_context>
chip_gen: v7x
topology: tpu7x:2x2x1
jax: 0.10.0
libtpu: 0.0.40
codegen_flags: <defaults>
</compile_context>

<pallas_src>
import numpy as np
import jax
import jax.numpy as jnp
from jax.experimental import pallas as pl
from jax.experimental.pallas import tpu as pltpu


def _discrete_embed_kernel(x_ref, emb_ref, o_ref):
    # x_ref:   (1, 1, 1, TL) float32  -- this tile's tokens, lane-dense
    # emb_ref: (Vp, H)       cdtype   -- zero-padded embedding table (+ CLS row)
    # o_ref:   (1, TL, H)    out_dtype
    xt = x_ref[0, 0]                                   # (1, TL)
    Vp, H = emb_ref.shape
    TL = xt.shape[-1]

    # Token ids exactly as PyTorch: t = x + 1; t[isnan(x)] = 0; t.long()
    ids = jnp.where(jnp.isnan(xt), 0.0, xt + 1.0).astype(jnp.int32)   # (1, TL)
    # Out-of-range / negative ids hit only zero-padded rows (or no row) -> zeros.
    # (PyTorch nn.Embedding would be UB / raise for those; valid data never does.)

    # Lane-major one-hot (cheap sublane-broadcast compare), one XLU transpose to
    # put tokens on the sublane axis, then a single MXU matmul does the gather.
    rows = jax.lax.broadcasted_iota(jnp.int32, (Vp, TL), 0)
    oh_t = (rows == ids).astype(jnp.float32)           # (Vp, TL), exact 0/1
    oh = jnp.transpose(oh_t, (1, 0)).astype(emb_ref.dtype)   # (TL, Vp)

    out = jnp.dot(oh, emb_ref[...], preferred_element_type=jnp.float32)
    o_ref[0] = out.astype(o_ref.dtype)


def discrete_embedding(x, emb_table, cls_token=None, *, cls_axis=-2,
                       tl=None, out_dtype=None):
    """x: (B, L) float (NaN = mask token).  emb_table: (num_embeddings + 1, H).

    Returns (B, L, H); with cls_token given (cls_axis=-2) returns (B, L+1, H).
    out_dtype defaults to the table dtype; pass jnp.bfloat16 to halve HBM writes.
    """
    B, L = x.shape
    V1, H = emb_table.shape
    if out_dtype is None:
        out_dtype = emb_table.dtype
    itemsize = np.dtype(out_dtype).itemsize
    # bf16-throughout when the output is bf16 (result identical: the op is a row
    # copy and rounding happens once); otherwise compute in f32.
    cdtype = (jnp.bfloat16 if np.dtype(out_dtype) == np.dtype(jnp.bfloat16)
              else jnp.float32)

    x = x.astype(jnp.float32)
    table = emb_table.astype(cdtype)
    if cls_token is not None:
        if cls_axis not in (-2, 1):
            # TODO(synk): non-default cls_axis would need a separate concat path.
            raise NotImplementedError("fused CLS only supports cls_axis=-2")
        # Fuse CLS: one extra table row + a sentinel token value mapping onto it.
        table = jnp.concatenate(
            [table, jnp.reshape(cls_token, (1, H)).astype(cdtype)], axis=0)
        sentinel = jnp.full((B, 1), float(V1 - 1), dtype=jnp.float32)  # id -> V1
        x = jnp.concatenate([sentinel, x], axis=1)
    Lt = x.shape[1]
    V2 = table.shape[0]

    # Pad vocab to a multiple of the 128-lane MXU width with zero rows (the
    # one-hot matmul then copies the selected row exactly; padding contributes 0).
    # TODO(synk): very large vocabs (>~4K) should switch to a DMA-gather path.
    Vp = max(128, ((V2 + 127) // 128) * 128)
    if Vp != V2:
        table = jnp.concatenate([table, jnp.zeros((Vp - V2, H), cdtype)], axis=0)

    # Token-tile size: multiple of 128, ~2 MiB output tile per pipeline buffer
    # (safe on v5e's 16 MiB default scoped VMEM; raise `tl` on v7x if desired).
    if tl is None:
        tl = ((2 << 20) // max(1, H * itemsize)) // 128 * 128
    tl = int(max(128, min(8192, tl)))
    tl = min(tl, max(128, ((Lt + 127) // 128) * 128))
    tl = max(128, (tl // 128) * 128)

    NT = (Lt + tl - 1) // tl
    Lp = NT * tl
    if Lp != Lt:
        # NaN padding embeds to the mask row; those rows are masked off at the
        # (partial) output-block write-back -- no post-kernel slice copy.
        x = jnp.concatenate(
            [x, jnp.full((B, Lp - Lt), jnp.nan, jnp.float32)], axis=1)
    x4 = x.reshape(B, NT, 1, tl)   # lane-dense, one contiguous tile per block

    cost = pl.CostEstimate(
        flops=int(2 * B * Lp * Vp * H),
        transcendentals=0,
        bytes_accessed=int(B * Lt * H * itemsize + B * Lp * 4
                           + Vp * H * np.dtype(cdtype).itemsize))

    out = pl.pallas_call(
        _discrete_embed_kernel,
        out_shape=jax.ShapeDtypeStruct((B, Lt, H), out_dtype),
        grid=(B, NT),
        in_specs=[
            pl.BlockSpec((1, 1, 1, tl), lambda b, t: (b, t, 0, 0)),  # per-tile x
            pl.BlockSpec((Vp, H), lambda b, t: (0, 0)),              # whole table
        ],
        out_specs=pl.BlockSpec((1, tl, H), lambda b, t: (b, t, 0)),
        compiler_params=pltpu.CompilerParams(
            dimension_semantics=("parallel", "parallel"),
            vmem_limit_bytes=32 * 1024 * 1024),
        cost_estimate=cost,
    )(x4, table)
    return out


if __name__ == "__main__":
    key = jax.random.PRNGKey(0)
    k1, k2, k3, k4 = jax.random.split(key, 4)

    B, L, H, V = 2, 512, 128, 4          # num_embeddings = 4 -> table has V+1 rows
    emb_table = jax.random.normal(k1, (V + 1, H), dtype=jnp.float32)

    vals = jax.random.randint(k2, (B, L), 0, V).astype(jnp.float32)
    nan_mask = jax.random.uniform(k3, (B, L)) < 0.25
    x = jnp.where(nan_mask, jnp.nan, vals)

    def reference(xv, table, cls_tok=None):
        t = jnp.where(jnp.isnan(xv), 0.0, xv + 1.0)      # PyTorch: (x+1).long(), NaN->0
        ids = t.astype(jnp.int32)
        ref = table[ids]
        if cls_tok is not None:
            cls_row = jnp.broadcast_to(cls_tok, (xv.shape[0], 1, table.shape[1]))
            ref = jnp.concatenate([cls_row.astype(table.dtype), ref], axis=1)
        return ref

    # cls=False path (module default: CLS is Identity).
    out = jax.block_until_ready(discrete_embedding(x, emb_table))
    ref = reference(x, emb_table)
    assert out.shape == (B, L, H)
    assert bool(jnp.allclose(out, ref, atol=1e-6)), "Pallas mismatch (no cls)"

    # cls=True path fused into the same kernel; L+1 = 513 exercises the partial
    # final output block (no post-kernel slice).  tl=128 forces a multi-tile grid.
    cls_tok = jax.random.normal(k4, (H,), dtype=jnp.float32)
    out_cls = jax.block_until_ready(
        discrete_embedding(x, emb_table, cls_token=cls_tok, tl=128))
    ref_cls = reference(x, emb_table, cls_tok)
    assert out_cls.shape == (B, L + 1, H)
    assert bool(jnp.allclose(out_cls, ref_cls, atol=1e-6)), "Pallas mismatch (cls)"

    # Same, with auto tile sizing (single partial block).
    out_cls2 = jax.block_until_ready(
        discrete_embedding(x, emb_table, cls_token=cls_tok))
    assert out_cls2.shape == (B, L + 1, H)
    assert bool(jnp.allclose(out_cls2, ref_cls, atol=1e-6)), "Pallas mismatch (cls auto)"

    # bf16-throughout path (table cast once; gather is still an exact row copy).
    out_bf = jax.block_until_ready(
        discrete_embedding(x, emb_table, out_dtype=jnp.bfloat16))
    ref_bf = reference(x, emb_table.astype(jnp.bfloat16))
    assert out_bf.dtype == jnp.bfloat16
    assert bool(jnp.allclose(out_bf.astype(jnp.float32),
                             ref_bf.astype(jnp.float32), atol=1e-6)), \
        "Pallas mismatch (bf16)"

    print("KERNEL_OK")
</pallas_src>

<mosaic_0001>
module attributes {stable_mosaic.version = 11 : i64} {
  func.func @_discrete_embed_kernel(%arg0: i32, %arg1: i32, %arg2: memref<1x1x1x512xf32, #tpu.memory_space<vmem>>, %arg3: memref<128x128xf32, #tpu.memory_space<vmem>>, %arg4: memref<1x512x128xf32, #tpu.memory_space<vmem>>) attributes {dimension_semantics = [#tpu.dimension_semantics<parallel>, #tpu.dimension_semantics<parallel>], iteration_bounds = array<i64: 2, 1>, scalar_prefetch = 0 : i64, scratch_operands = 0 : i64, tpu.core_type = #tpu.core_type<tc>, window_params = [{transform_indices = @transform_0, window_bounds = array<i64: 1, 1, 1, 512>}, {pipeline_mode = #tpu.pipeline_mode<synchronous>, transform_indices = @transform_1, window_bounds = array<i64: 128, 128>}, {transform_indices = @transform_2, window_bounds = array<i64: 1, 512, 128>}]} {
    %c0 = arith.constant 0 : index
    %c0_0 = arith.constant 0 : index
    %c0_1 = arith.constant 0 : index
    %c0_2 = arith.constant 0 : index
    %0 = vector.load %arg2[%c0, %c0_0, %c0_1, %c0_2] : memref<1x1x1x512xf32, #tpu.memory_space<vmem>>, vector<1x1x1x512xf32>
    %1 = vector.shape_cast %0 : vector<1x1x1x512xf32> to vector<1x512xf32>
    %2 = arith.cmpf one, %1, %1 : vector<1x512xf32>
    %cst = arith.constant 1.000000e+00 : f32
    %3 = vector.broadcast %cst : f32 to vector<1x512xf32>
    %4 = arith.addf %1, %3 : vector<1x512xf32>
    %cst_3 = arith.constant 0.000000e+00 : f32
    %5 = vector.broadcast %cst_3 : f32 to vector<1x512xf32>
    %6 = arith.select %2, %5, %4 : vector<1x512xi1>, vector<1x512xf32>
    %7 = arith.fptosi %6 : vector<1x512xf32> to vector<1x512xi32>
    %8 = tpu.iota {dimensions = array<i32: 0>} : vector<128x512xi32>
    %9 = vector.broadcast %7 : vector<1x512xi32> to vector<128x512xi32>
    %10 = arith.cmpi eq, %8, %9 : vector<128x512xi32>
    %11 = arith.extui %10 : vector<128x512xi1> to vector<128x512xi32>
    %12 = arith.sitofp %11 : vector<128x512xi32> to vector<128x512xf32>
    %13 = tpu.transpose %12, [1, 0] : vector<128x512xf32> -> vector<512x128xf32>
    %c0_4 = arith.constant 0 : index
    %c0_5 = arith.constant 0 : index
    %14 = vector.load %arg3[%c0_4, %c0_5] : memref<128x128xf32, #tpu.memory_space<vmem>>, vector<128x128xf32>
    %cst_6 = arith.constant dense<0.000000e+00> : vector<512x128xf32>
    %15 = tpu.matmul %13, %14, %cst_6 {dimension_numbers = #tpu.dot_dimension_numbers<[1], [0], [0], [1], [0, 0, 1, 1], [], []>} : vector<512x128xf32>, vector<128x128xf32>, vector<512x128xf32> -> vector<512x128xf32>
    %c0_7 = arith.constant 0 : index
    %c0_8 = arith.constant 0 : index
    %c0_9 = arith.constant 0 : index
    %16 = vector.load %arg4[%c0_7, %c0_8, %c0_9] : memref<1x512x128xf32, #tpu.memory_space<vmem>>, vector<1x512x128xf32>
    %17 = vector.shape_cast %16 : vector<1x512x128xf32> to vector<512x128xf32>
    %18 = vector.shape_cast %15 : vector<512x128xf32> to vector<1x512x128xf32>
    tpu.vector_store %arg4[%c0_7, %c0_8, %c0_9], %18 {strides = array<i32>} : memref<1x512x128xf32, #tpu.memory_space<vmem>>, vector<1x512x128xf32>,
    return
  }
  func.func @transform_0(%arg0: i32, %arg1: i32) -> (i32, i32, i32, i32) {
    %c0_i32 = arith.constant 0 : i32
    %c0_i32_0 = arith.constant 0 : i32
    %c0_i32_1 = arith.constant 0 : i32
    return %arg0, %arg1, %c0_i32, %c0_i32_0 : i32, i32, i32, i32
  }
  func.func @transform_1(%arg0: i32, %arg1: i32) -> (i32, i32) {
    %c0_i32 = arith.constant 0 : i32
    %c0_i32_0 = arith.constant 0 : i32
    %c0_i32_1 = arith.constant 0 : i32
    return %c0_i32, %c0_i32_0 : i32, i32
  }
  func.func @transform_2(%arg0: i32, %arg1: i32) -> (i32, i32, i32) {
    %c0_i32 = arith.constant 0 : i32
    %c0_i32_0 = arith.constant 0 : i32
    return %arg0, %arg1, %c0_i32 : i32, i32, i32
  }
}

</mosaic_0001>

<llo_original>
// kernel: tpu_custom_call.1
$region0: #{tpu_custom_call.1}
  #allocation0 [shape = 'u32[]', space=smem, size = 0x4, offset = 0x4, fixed_abs, tag = 'smem constant byte address 0x4 - core index']
  #allocation1 [shape = 'u32[144,128]{1,0:T(1,128)}', space=vmem, size = 0x12000, scoped, tag = 'internal scratch']
  %s0 = inlined_call_operand.hbm [shape: f32[2,1,1,512], index: 0, kind: input, shape index: {}]
  %s1 = inlined_call_operand.hbm [shape: f32[128,128], index: 1, kind: input, shape index: {}]
  %s2 = inlined_call_operand.hbm [shape: f32[2,512,128], index: 2, kind: output, shape index: {}]
  %s3 = sld [smem:[#allocation0]]
  $region49: #{tpu_custom_call.1} parent=0
    _
  %s5 = ssub.s32 1, %s3
  %s6 = scalar_select 0, %s5, %s3
  $region1: #{tpu_custom_call.1} parent=0
    #allocation2 [shape = 'u8[4096]{0}', space=vmem, size = 0x1000, scoped, tag = 'input window, operand 0']
    #allocation3 [shape = 's32[2]{0}', space=sflag, size = 0x8, scoped, tag = 'scoped memory for tpu_custom_call.1']
    #allocation4 [shape = 's32[2]{0}', space=sflag, size = 0x8, scoped, tag = 'scoped memory for tpu_custom_call.1']
    #allocation5 [shape = 'u8[65536]{0}', space=vmem, size = 0x10000, scoped, tag = 'input window, operand 1, single buffered']
    #allocation6 [shape = 's32[1]{0}', space=sflag, size = 0x4, scoped, tag = 'scoped memory for tpu_custom_call.1']
    #allocation7 [shape = 'u8[524288]{0}', space=vmem, size = 0x80000, scoped, tag = 'output window, operand 0']
    %7 = vsyncpa [#allocation3], 0
    %s8 = scalar_lea.sflag [#allocation3], 1
    %9 = vsyncpa %s8, 0
    %10 = vsyncpa [#allocation6], 0
    %11 = vsyncpa [#allocation4], 0
    %s12 = scalar_lea.sflag [#allocation4], 1
    %13 = vsyncpa %s12, 0
    loop: start=0, step=1, limit=4
    $region2: #{tpu_custom_call.1} parent=1 // loop_pre_header
      _
    $region3: #{tpu_custom_call.1} parent=1 // loop_header
      %s15 = sphi 0, %s19
      %p16 = scmp.ge.s32.totalorder %s15, 4
      %s22 = sphi 0, %s34
      %s23 = sphi 0, %s30
      %s24 = sphi 0, %s22
      %s25 = sphi 0, %s23
      %s26 = sphi 0, %s24
      %s27 = sphi 0, %s25
      %s39 = sphi 0, %s41
      %s42 = sphi 0, %s39
      %s43 = sphi 0, %s42
      %s59 = sphi 0, %s43
      %s63 = sphi 0, %s63
      %s65 = sphi 0, %s63
      %s66 = sphi 0, %s65
      %s80 = sphi 0, %s66
      %s88 = sphi 0, %s90
      %s91 = sphi 0, %s88
      %s92 = sphi 0, %s91
      %s108 = sphi 0, %s92
    $region4: #{tpu_custom_call.1} parent=1 // loop_header_branch
      %18 = sbr.rel (%p16) target = $region8
    $region5: #{tpu_custom_call.1} parent=1 // loop_body
      %s20 = ssub.s32 %s15, 1
      %s21 = ssub.s32 %s15, 2
      %s28 = sadd.s32 1, %s23
      %p29 = scmp.ge.s32.totalorder %s28, 1
      %s30 = scalar_select %p29, 0, %s28
      %s31 = sadd.s32 1, %s22
      %s32 = scalar_select %p29, %s31, %s22
      %p33 = scmp.ge.s32.totalorder %s32, 2
      %s34 = scalar_select %p33, 0, %s32
      %s35 = ssub.s32 %s22, %s34
      %s36 = ssub.s32 %s23, %s30
      %s37 = sor.u32 %s35, %s36
      %p38 = scmp.eq.s32.totalorder %s37, 0
      %s40 = sadd.s32 %s39, 1
      %s41 = scalar_select %p38, %s39, %s40
      %p44 = pneg %p38
      %p45 = scmp.eq.s32.totalorder %s15, 1
      %p46 = por %p44, %p45
      %p47 = scmp.ne.s32.totalorder %s39, %s42
      %p48 = scmp.eq.s32.totalorder %s15, 0
      %p49 = por %p47, %p48
      %p50 = scmp.ne.s32.totalorder %s39, %s42
      %p51 = scmp.eq.s32.totalorder %s20, 1
      %p52 = por %p50, %p51
      %p53 = scmp.ne.s32.totalorder %s42, %s43
      %p54 = scmp.eq.s32.totalorder %s20, 0
      %p55 = por %p53, %p54
      %p56 = scmp.ne.s32.totalorder %s42, %s43
      %p57 = scmp.eq.s32.totalorder %s21, 1
      %p58 = por %p56, %p57
      %p60 = scmp.ne.s32.totalorder %s43, %s59
      %p61 = scmp.eq.s32.totalorder %s21, 0
      %p62 = por %p60, %p61
      %s64 = sadd.s32 %s63, 1
      %p67 = scmp.eq.s32.totalorder %s15, 1
      %p68 = scmp.ne.s32.totalorder %s63, %s65
      %p69 = scmp.eq.s32.totalorder %s15, 0
      %p70 = por %p68, %p69
      %p71 = scmp.ne.s32.totalorder %s63, %s65
      %p72 = scmp.eq.s32.totalorder %s20, 1
      %p73 = por %p71, %p72
      %p74 = scmp.ne.s32.totalorder %s65, %s66
      %p75 = scmp.eq.s32.totalorder %s20, 0
      %p76 = por %p74, %p75
      %p77 = scmp.ne.s32.totalorder %s65, %s66
      %p78 = scmp.eq.s32.totalorder %s21, 1
      %p79 = por %p77, %p78
      %p81 = scmp.ne.s32.totalorder %s66, %s80
      %p82 = scmp.eq.s32.totalorder %s21, 0
      %p83 = por %p81, %p82
      %s84 = ssub.s32 %s22, %s34
      %s85 = ssub.s32 %s23, %s30
      %s86 = sor.u32 %s84, %s85
      %p87 = scmp.eq.s32.totalorder %s86, 0
      %s89 = sadd.s32 %s88, 1
      %s90 = scalar_select %p87, %s88, %s89
      %p93 = pneg %p87
      %p94 = scmp.eq.s32.totalorder %s15, 1
      %p95 = por %p93, %p94
      %p96 = scmp.ne.s32.totalorder %s88, %s91
      %p97 = scmp.eq.s32.totalorder %s15, 0
      %p98 = por %p96, %p97
      %p99 = scmp.ne.s32.totalorder %s88, %s91
      %p100 = scmp.eq.s32.totalorder %s20, 1
      %p101 = por %p99, %p100
      %p102 = scmp.ne.s32.totalorder %s91, %s92
      %p103 = scmp.eq.s32.totalorder %s20, 0
      %p104 = por %p102, %p103
      %p105 = scmp.ne.s32.totalorder %s91, %s92
      %p106 = scmp.eq.s32.totalorder %s21, 1
      %p107 = por %p105, %p106
      %p109 = scmp.ne.s32.totalorder %s92, %s108
      %p110 = scmp.eq.s32.totalorder %s21, 0
      %p111 = por %p109, %p110
      %p112 = scmp.le.s32.totalorder 1, %s15
      %p113 = scmp.lt.s32.totalorder %s15, 3
      %p114 = pnand %p112, %p113
      %p115 = pneg %p114
      // Predicated region
      $region9: #{tpu_custom_call.1} parent=5 // pred_check
        _
      $region10: #{tpu_custom_call.1} parent=5 // pred_check_branch
        %117 = sbr.rel (%p114) target = $region12
      $region11: #{tpu_custom_call.1} parent=5 // pred_region
        %s118 = ssub.s32 %s15, 1
        // Predicated region
        $region13: #{tpu_custom_call.1} parent=11 // pred_check
          %p119 = pneg %p76
        $region14: #{tpu_custom_call.1} parent=11 // pred_check_branch
          %121 = sbr.rel (%p119) target = $region16
        $region15: #{tpu_custom_call.1} parent=11 // pred_region
          %s123 = ssub.s32 2048, 2048
          %124 = vsyncadd [#allocation6], %s123
          %s125 = sshll.u32 [#allocation5], 4
          %s126 = int_to_ptr.vmem [resolvable:$true] %s125
          %131 = dma.hbm_to_vmem [thread:$0]  %s1, 2048, %s126, [#allocation6], 128, 128, 8
        $region16: #{tpu_custom_call.1} parent=11 // pred_fallthru
          _
      $region12: #{tpu_custom_call.1} parent=5 // pred_fallthru
        _
      %p132 = scmp.lt.s32.totalorder %s15, 2
      // Predicated region
      $region17: #{tpu_custom_call.1} parent=5 // pred_check
        %p133 = pneg %p132
      $region18: #{tpu_custom_call.1} parent=5 // pred_check_branch
        %135 = sbr.rel (%p133) target = $region20
      $region19: #{tpu_custom_call.1} parent=5 // pred_region
        // Predicated region
        $region21: #{tpu_custom_call.1} parent=19 // pred_check
          %p136 = pneg %p49
        $region22: #{tpu_custom_call.1} parent=19 // pred_check_branch
          %138 = sbr.rel (%p136) target = $region24
        $region23: #{tpu_custom_call.1} parent=19 // pred_region
          %s139 = sand.u32 %s39, 1
          %s140 = scalar_lea.sflag [#allocation3], %s139
          %s141 = sand.u32 %s39, 1
          %s142 = smul.addr %s141, 4
          %s143 = scalar_lea.vmem [#allocation2], %s142
          %s145 = ssub.s32 64, 64
          %146 = vsyncadd %s140, %s145
          %s147 = smul.addr %s23, 4
          %s148 = smul.addr %s22, 4
          %s149 = sadd.s32 %s147, %s148
          %s150 = smul.addr %s149, 16
          %s151 = scalar_lea.hbm %s0, %s150
          %s153 = sshll.u32 %s143, 4
          %s154 = int_to_ptr.vmem [resolvable:$true] %s153
          %156 = dma.hbm_to_vmem [thread:$0]  %s151, 64, %s154, %s140
        $region24: #{tpu_custom_call.1} parent=19 // pred_fallthru
          _
      $region20: #{tpu_custom_call.1} parent=5 // pred_fallthru
        _
      %p157 = scmp.le.s32.totalorder 1, %s15
      %p158 = scmp.lt.s32.totalorder %s15, 3
      %p159 = pnand %p157, %p158
      %p160 = pneg %p159
      // Predicated region
      $region25: #{tpu_custom_call.1} parent=5 // pred_check
        _
      $region26: #{tpu_custom_call.1} parent=5 // pred_check_branch
        %162 = sbr.rel (%p159) target = $region28
      $region27: #{tpu_custom_call.1} parent=5 // pred_region
        %s163 = ssub.s32 %s15, 1
        %s164 = sand.u32 %s42, 1
        %s165 = scalar_lea.sflag [#allocation3], %s164
        %s166 = sand.u32 %s42, 1
        %s167 = smul.addr %s166, 4
        %s168 = scalar_lea.vmem [#allocation2], %s167
        // Predicated region
        $region29: #{tpu_custom_call.1} parent=27 // pred_check
          %p169 = pneg %p55
        $region30: #{tpu_custom_call.1} parent=27 // pred_check_branch
          %171 = sbr.rel (%p169) target = $region32
        $region31: #{tpu_custom_call.1} parent=27 // pred_region
          %172 = dma.done %s165, 64
        $region32: #{tpu_custom_call.1} parent=27 // pred_fallthru
          _
        // Predicated region
        $region33: #{tpu_custom_call.1} parent=27 // pred_check
          %p173 = pneg %p76
        $region34: #{tpu_custom_call.1} parent=27 // pred_check_branch
          %175 = sbr.rel (%p173) target = $region36
        $region35: #{tpu_custom_call.1} parent=27 // pred_region
          %176 = dma.done [#allocation6], 2048
        $region36: #{tpu_custom_call.1} parent=27 // pred_fallthru
          _
        %s177 = sand.u32 %s42, 1
        %s178 = scalar_lea.sflag [#allocation3], %s177
        %s179 = sand.u32 %s42, 1
        %s180 = smul.addr %s179, 4
        %s181 = scalar_lea.vmem [#allocation2], %s180
        %p182 = pneg %p55
        %p183 = pneg %p52
        %p184 = pneg %p76
        %p185 = pneg %p73
        %p186 = pneg %p104
        %p187 = pneg %p101
        %s188 = sand.u32 %s91, 1
        %s189 = scalar_lea.sflag [#allocation4], %s188
        %s190 = sand.u32 %s91, 1
        %s191 = smul.addr %s190, 512
        %s192 = scalar_lea.vmem [#allocation7], %s191
        %s193 = smul.u32 64, %s25
        %v194 = vld [vmem:[%s168] sm:$0xf]
        %vm195 = vcmp.ne.f32.partialorder %v194, %v194
        %v196 = vadd.f32 %v194, 1.0
        %v197 = vsel %vm195, 0.0, %v196
        %v198 = vcvt.f32.s32.to.zero.pseudo %v197
        %v199 = vlaneseq
        %v200 = vshrl.u32 %v199, 7
        %v201 = vadd.s32 %v200, 8
        %v202 = vadd.s32 %v200, 16
        %v203 = vadd.s32 %v200, 24
        %v204 = vadd.s32 %v200, 32
        %v205 = vadd.s32 %v200, 40
        %v206 = vadd.s32 %v200, 48
        %v207 = vadd.s32 %v200, 56
        %v208 = vadd.s32 %v200, 64
        %v209 = vadd.s32 %v200, 72
        %v210 = vadd.s32 %v200, 80
        %v211 = vadd.s32 %v200, 88
        %v212 = vadd.s32 %v200, 96
        %v213 = vadd.s32 %v200, 104
        %v214 = vadd.s32 %v200, 112
        %v215 = vadd.s32 %v200, 120
        %v216 = vlaneseq
        %v217 = vshrl.u32 %v216, 7
        %v218 = vsub.s32 0, %v217
        %v219 = vrot.slane %v198, %v218
        %v220 = vlaneseq
        %v221 = vshrl.u32 %v220, 7
        %v222 = vsub.s32 1, %v221
        %v223 = vrot.slane %v198, %v222
        %v224 = vlaneseq
        %v225 = vshrl.u32 %v224, 7
        %v226 = vsub.s32 2, %v225
        %v227 = vrot.slane %v198, %v226
        %v228 = vlaneseq
        %v229 = vshrl.u32 %v228, 7
        %v230 = vsub.s32 3, %v229
        %v231 = vrot.slane %v198, %v230
        %vm232 = vcmp.eq.s32.totalorder %v200, %v219
        %vm233 = vcmp.eq.s32.totalorder %v200, %v223
        %vm234 = vcmp.eq.s32.totalorder %v200, %v227
        %vm235 = vcmp.eq.s32.totalorder %v200, %v231
        %vm236 = vcmp.eq.s32.totalorder %v201, %v219
        %vm237 = vcmp.eq.s32.totalorder %v201, %v223
        %vm238 = vcmp.eq.s32.totalorder %v201, %v227
        %vm239 = vcmp.eq.s32.totalorder %v201, %v231
        %vm240 = vcmp.eq.s32.totalorder %v202, %v219
        %vm241 = vcmp.eq.s32.totalorder %v202, %v223
        %vm242 = vcmp.eq.s32.totalorder %v202, %v227
        %vm243 = vcmp.eq.s32.totalorder %v202, %v231
        %vm244 = vcmp.eq.s32.totalorder %v203, %v219
        %vm245 = vcmp.eq.s32.totalorder %v203, %v223
        %vm246 = vcmp.eq.s32.totalorder %v203, %v227
        %vm247 = vcmp.eq.s32.totalorder %v203, %v231
        %vm248 = vcmp.eq.s32.totalorder %v204, %v219
        %vm249 = vcmp.eq.s32.totalorder %v204, %v223
        %vm250 = vcmp.eq.s32.totalorder %v204, %v227
        %vm251 = vcmp.eq.s32.totalorder %v204, %v231
        %vm252 = vcmp.eq.s32.totalorder %v205, %v219
        %vm253 = vcmp.eq.s32.totalorder %v205, %v223
        %vm254 = vcmp.eq.s32.totalorder %v205, %v227
        %vm255 = vcmp.eq.s32.totalorder %v205, %v231
        %vm256 = vcmp.eq.s32.totalorder %v206, %v219
        %vm257 = vcmp.eq.s32.totalorder %v206, %v223
        %vm258 = vcmp.eq.s32.totalorder %v206, %v227
        %vm259 = vcmp.eq.s32.totalorder %v206, %v231
        %vm260 = vcmp.eq.s32.totalorder %v207, %v219
        %vm261 = vcmp.eq.s32.totalorder %v207, %v223
        %vm262 = vcmp.eq.s32.totalorder %v207, %v227
        %vm263 = vcmp.eq.s32.totalorder %v207, %v231
        %vm264 = vcmp.eq.s32.totalorder %v208, %v219
        %vm265 = vcmp.eq.s32.totalorder %v208, %v223
        %vm266 = vcmp.eq.s32.totalorder %v208, %v227
        %vm267 = vcmp.eq.s32.totalorder %v208, %v231
        %vm268 = vcmp.eq.s32.totalorder %v209, %v219
        %vm269 = vcmp.eq.s32.totalorder %v209, %v223
        %vm270 = vcmp.eq.s32.totalorder %v209, %v227
        %vm271 = vcmp.eq.s32.totalorder %v209, %v231
        %vm272 = vcmp.eq.s32.totalorder %v210, %v219
        %vm273 = vcmp.eq.s32.totalorder %v210, %v223
        %vm274 = vcmp.eq.s32.totalorder %v210, %v227
        %vm275 = vcmp.eq.s32.totalorder %v210, %v231
        %vm276 = vcmp.eq.s32.totalorder %v211, %v219
        %vm277 = vcmp.eq.s32.totalorder %v211, %v223
        %vm278 = vcmp.eq.s32.totalorder %v211, %v227
        %vm279 = vcmp.eq.s32.totalorder %v211, %v231
        %vm280 = vcmp.eq.s32.totalorder %v212, %v219
        %vm281 = vcmp.eq.s32.totalorder %v212, %v223
        %vm282 = vcmp.eq.s32.totalorder %v212, %v227
        %vm283 = vcmp.eq.s32.totalorder %v212, %v231
        %vm284 = vcmp.eq.s32.totalorder %v213, %v219
        %vm285 = vcmp.eq.s32.totalorder %v213, %v223
        %vm286 = vcmp.eq.s32.totalorder %v213, %v227
        %vm287 = vcmp.eq.s32.totalorder %v213, %v231
        %vm288 = vcmp.eq.s32.totalorder %v214, %v219
        %vm289 = vcmp.eq.s32.totalorder %v214, %v223
        %vm290 = vcmp.eq.s32.totalorder %v214, %v227
        %vm291 = vcmp.eq.s32.totalorder %v214, %v231
        %vm292 = vcmp.eq.s32.totalorder %v215, %v219
        %vm293 = vcmp.eq.s32.totalorder %v215, %v223
        %vm294 = vcmp.eq.s32.totalorder %v215, %v227
        %vm295 = vcmp.eq.s32.totalorder %v215, %v231
        %v296 = vsel %vm232, 1, 0
        %v297 = vsel %vm233, 1, 0
        %v298 = vsel %vm234, 1, 0
        %v299 = vsel %vm235, 1, 0
        %v300 = vsel %vm236, 1, 0
        %v301 = vsel %vm237, 1, 0
        %v302 = vsel %vm238, 1, 0
        %v303 = vsel %vm239, 1, 0
        %v304 = vsel %vm240, 1, 0
        %v305 = vsel %vm241, 1, 0
        %v306 = vsel %vm242, 1, 0
        %v307 = vsel %vm243, 1, 0
        %v308 = vsel %vm244, 1, 0
        %v309 = vsel %vm245, 1, 0
        %v310 = vsel %vm246, 1, 0
        %v311 = vsel %vm247, 1, 0
        %v312 = vsel %vm248, 1, 0
        %v313 = vsel %vm249, 1, 0
        %v314 = vsel %vm250, 1, 0
        %v315 = vsel %vm251, 1, 0
        %v316 = vsel %vm252, 1, 0
        %v317 = vsel %vm253, 1, 0
        %v318 = vsel %vm254, 1, 0
        %v319 = vsel %vm255, 1, 0
        %v320 = vsel %vm256, 1, 0
        %v321 = vsel %vm257, 1, 0
        %v322 = vsel %vm258, 1, 0
        %v323 = vsel %vm259, 1, 0
        %v324 = vsel %vm260, 1, 0
        %v325 = vsel %vm261, 1, 0
        %v326 = vsel %vm262, 1, 0
        %v327 = vsel %vm263, 1, 0
        %v328 = vsel %vm264, 1, 0
        %v329 = vsel %vm265, 1, 0
        %v330 = vsel %vm266, 1, 0
        %v331 = vsel %vm267, 1, 0
        %v332 = vsel %vm268, 1, 0
        %v333 = vsel %vm269, 1, 0
        %v334 = vsel %vm270, 1, 0
        %v335 = vsel %vm271, 1, 0
        %v336 = vsel %vm272, 1, 0
        %v337 = vsel %vm273, 1, 0
        %v338 = vsel %vm274, 1, 0
        %v339 = vsel %vm275, 1, 0
        %v340 = vsel %vm276, 1, 0
        %v341 = vsel %vm277, 1, 0
        %v342 = vsel %vm278, 1, 0
        %v343 = vsel %vm279, 1, 0
        %v344 = vsel %vm280, 1, 0
        %v345 = vsel %vm281, 1, 0
        %v346 = vsel %vm282, 1, 0
        %v347 = vsel %vm283, 1, 0
        %v348 = vsel %vm284, 1, 0
        %v349 = vsel %vm285, 1, 0
        %v350 = vsel %vm286, 1, 0
        %v351 = vsel %vm287, 1, 0
        %v352 = vsel %vm288, 1, 0
        %v353 = vsel %vm289, 1, 0
        %v354 = vsel %vm290, 1, 0
        %v355 = vsel %vm291, 1, 0
        %v356 = vsel %vm292, 1, 0
        %v357 = vsel %vm293, 1, 0
        %v358 = vsel %vm294, 1, 0
        %v359 = vsel %vm295, 1, 0
        %v360 = vcvt.s32.f32 %v296
        %v361 = vcvt.s32.f32 %v297
        %v362 = vcvt.s32.f32 %v298
        %v363 = vcvt.s32.f32 %v299
        %v364 = vcvt.s32.f32 %v300
        %v365 = vcvt.s32.f32 %v301
        %v366 = vcvt.s32.f32 %v302
        %v367 = vcvt.s32.f32 %v303
        %v368 = vcvt.s32.f32 %v304
        %v369 = vcvt.s32.f32 %v305
        %v370 = vcvt.s32.f32 %v306
        %v371 = vcvt.s32.f32 %v307
        %v372 = vcvt.s32.f32 %v308
        %v373 = vcvt.s32.f32 %v309
        %v374 = vcvt.s32.f32 %v310
        %v375 = vcvt.s32.f32 %v311
        %v376 = vcvt.s32.f32 %v312
        %v377 = vcvt.s32.f32 %v313
        %v378 = vcvt.s32.f32 %v314
        %v379 = vcvt.s32.f32 %v315
        %v380 = vcvt.s32.f32 %v316
        %v381 = vcvt.s32.f32 %v317
        %v382 = vcvt.s32.f32 %v318
        %v383 = vcvt.s32.f32 %v319
        %v384 = vcvt.s32.f32 %v320
        %v385 = vcvt.s32.f32 %v321
        %v386 = vcvt.s32.f32 %v322
        %v387 = vcvt.s32.f32 %v323
        %v388 = vcvt.s32.f32 %v324
        %v389 = vcvt.s32.f32 %v325
        %v390 = vcvt.s32.f32 %v326
        %v391 = vcvt.s32.f32 %v327
        %v392 = vcvt.s32.f32 %v328
        %v393 = vcvt.s32.f32 %v329
        %v394 = vcvt.s32.f32 %v330
        %v395 = vcvt.s32.f32 %v331
        %v396 = vcvt.s32.f32 %v332
        %v397 = vcvt.s32.f32 %v333
        %v398 = vcvt.s32.f32 %v334
        %v399 = vcvt.s32.f32 %v335
        %v400 = vcvt.s32.f32 %v336
        %v401 = vcvt.s32.f32 %v337
        %v402 = vcvt.s32.f32 %v338
        %v403 = vcvt.s32.f32 %v339
        %v404 = vcvt.s32.f32 %v340
        %v405 = vcvt.s32.f32 %v341
        %v406 = vcvt.s32.f32 %v342
        %v407 = vcvt.s32.f32 %v343
        %v408 = vcvt.s32.f32 %v344
        %v409 = vcvt.s32.f32 %v345
        %v410 = vcvt.s32.f32 %v346
        %v411 = vcvt.s32.f32 %v347
        %v412 = vcvt.s32.f32 %v348
        %v413 = vcvt.s32.f32 %v349
        %v414 = vcvt.s32.f32 %v350
        %v415 = vcvt.s32.f32 %v351
        %v416 = vcvt.s32.f32 %v352
        %v417 = vcvt.s32.f32 %v353
        %v418 = vcvt.s32.f32 %v354
        %v419 = vcvt.s32.f32 %v355
        %v420 = vcvt.s32.f32 %v356
        %v421 = vcvt.s32.f32 %v357
        %v422 = vcvt.s32.f32 %v358
        %v423 = vcvt.s32.f32 %v359
        %424 = vxpose.xlu0.b32.start [1/16] %v360, 128
        %425 = vxpose.xlu0.b32.cont [2/16] %v364, 128
        %426 = vxpose.xlu0.b32.cont [3/16] %v368, 128
        %427 = vxpose.xlu0.b32.cont [4/16] %v372, 128
        %428 = vxpose.xlu0.b32.cont [5/16] %v376, 128
        %429 = vxpose.xlu0.b32.cont [6/16] %v380, 128
        %430 = vxpose.xlu0.b32.cont [7/16] %v384, 128
        %431 = vxpose.xlu0.b32.cont [8/16] %v388, 128
        %432 = vxpose.xlu0.b32.cont [9/16] %v392, 128
        %433 = vxpose.xlu0.b32.cont [10/16] %v396, 128
        %434 = vxpose.xlu0.b32.cont [11/16] %v400, 128
        %435 = vxpose.xlu0.b32.cont [12/16] %v404, 128
        %436 = vxpose.xlu0.b32.cont [13/16] %v408, 128
        %437 = vxpose.xlu0.b32.cont [14/16] %v412, 128
        %438 = vxpose.xlu0.b32.cont [15/16] %v416, 128
        %439 = vxpose.xlu0.b32.end [16/16] %v420, 128
        %v440 = vpop.trf.xlu0
        %v441 = vpop.trf.xlu0
        %v442 = vpop.trf.xlu0
        %v443 = vpop.trf.xlu0
        %v444 = vpop.trf.xlu0
        %v445 = vpop.trf.xlu0
        %v446 = vpop.trf.xlu0
        %v447 = vpop.trf.xlu0
        %v448 = vpop.trf.xlu0
        %v449 = vpop.trf.xlu0
        %v450 = vpop.trf.xlu0
        %v451 = vpop.trf.xlu0
        %v452 = vpop.trf.xlu0
        %v453 = vpop.trf.xlu0
        %v454 = vpop.trf.xlu0
        %v455 = vpop.trf.xlu0
        %456 = vxpose.xlu0.b32.start [1/16] %v361, 128
        %457 = vxpose.xlu0.b32.cont [2/16] %v365, 128
        %458 = vxpose.xlu0.b32.cont [3/16] %v369, 128
        %459 = vxpose.xlu0.b32.cont [4/16] %v373, 128
        %460 = vxpose.xlu0.b32.cont [5/16] %v377, 128
        %461 = vxpose.xlu0.b32.cont [6/16] %v381, 128
        %462 = vxpose.xlu0.b32.cont [7/16] %v385, 128
        %463 = vxpose.xlu0.b32.cont [8/16] %v389, 128
        %464 = vxpose.xlu0.b32.cont [9/16] %v393, 128
        %465 = vxpose.xlu0.b32.cont [10/16] %v397, 128
        %466 = vxpose.xlu0.b32.cont [11/16] %v401, 128
        %467 = vxpose.xlu0.b32.cont [12/16] %v405, 128
        %468 = vxpose.xlu0.b32.cont [13/16] %v409, 128
        %469 = vxpose.xlu0.b32.cont [14/16] %v413, 128
        %470 = vxpose.xlu0.b32.cont [15/16] %v417, 128
        %471 = vxpose.xlu0.b32.end [16/16] %v421, 128
        %v472 = vpop.trf.xlu0
        %v473 = vpop.trf.xlu0
        %v474 = vpop.trf.xlu0
        %v475 = vpop.trf.xlu0
        %v476 = vpop.trf.xlu0
        %v477 = vpop.trf.xlu0
        %v478 = vpop.trf.xlu0
        %v479 = vpop.trf.xlu0
        %v480 = vpop.trf.xlu0
        %v481 = vpop.trf.xlu0
        %v482 = vpop.trf.xlu0
        %v483 = vpop.trf.xlu0
        %v484 = vpop.trf.xlu0
        %v485 = vpop.trf.xlu0
        %v486 = vpop.trf.xlu0
        %v487 = vpop.trf.xlu0
        %488 = vxpose.xlu0.b32.start [1/16] %v362, 128
        %489 = vxpose.xlu0.b32.cont [2/16] %v366, 128
        %490 = vxpose.xlu0.b32.cont [3/16] %v370, 128
        %491 = vxpose.xlu0.b32.cont [4/16] %v374, 128
        %492 = vxpose.xlu0.b32.cont [5/16] %v378, 128
        %493 = vxpose.xlu0.b32.cont [6/16] %v382, 128
        %494 = vxpose.xlu0.b32.cont [7/16] %v386, 128
        %495 = vxpose.xlu0.b32.cont [8/16] %v390, 128
        %496 = vxpose.xlu0.b32.cont [9/16] %v394, 128
        %497 = vxpose.xlu0.b32.cont [10/16] %v398, 128
        %498 = vxpose.xlu0.b32.cont [11/16] %v402, 128
        %499 = vxpose.xlu0.b32.cont [12/16] %v406, 128
        %500 = vxpose.xlu0.b32.cont [13/16] %v410, 128
        %501 = vxpose.xlu0.b32.cont [14/16] %v414, 128
        %502 = vxpose.xlu0.b32.cont [15/16] %v418, 128
        %503 = vxpose.xlu0.b32.end [16/16] %v422, 128
        %v504 = vpop.trf.xlu0
        %v505 = vpop.trf.xlu0
        %v506 = vpop.trf.xlu0
        %v507 = vpop.trf.xlu0
        %v508 = vpop.trf.xlu0
        %v509 = vpop.trf.xlu0
        %v510 = vpop.trf.xlu0
        %v511 = vpop.trf.xlu0
        %v512 = vpop.trf.xlu0
        %v513 = vpop.trf.xlu0
        %v514 = vpop.trf.xlu0
        %v515 = vpop.trf.xlu0
        %v516 = vpop.trf.xlu0
        %v517 = vpop.trf.xlu0
        %v518 = vpop.trf.xlu0
        %v519 = vpop.trf.xlu0
        %520 = vxpose.xlu0.b32.start [1/16] %v363, 128
        %521 = vxpose.xlu0.b32.cont [2/16] %v367, 128
        %522 = vxpose.xlu0.b32.cont [3/16] %v371, 128
        %523 = vxpose.xlu0.b32.cont [4/16] %v375, 128
        %524 = vxpose.xlu0.b32.cont [5/16] %v379, 128
        %525 = vxpose.xlu0.b32.cont [6/16] %v383, 128
        %526 = vxpose.xlu0.b32.cont [7/16] %v387, 128
        %527 = vxpose.xlu0.b32.cont [8/16] %v391, 128
        %528 = vxpose.xlu0.b32.cont [9/16] %v395, 128
        %529 = vxpose.xlu0.b32.cont [10/16] %v399, 128
        %530 = vxpose.xlu0.b32.cont [11/16] %v403, 128
        %531 = vxpose.xlu0.b32.cont [12/16] %v407, 128
        %532 = vxpose.xlu0.b32.cont [13/16] %v411, 128
        %533 = vxpose.xlu0.b32.cont [14/16] %v415, 128
        %534 = vxpose.xlu0.b32.cont [15/16] %v419, 128
        %535 = vxpose.xlu0.b32.end [16/16] %v423, 128
        %v536 = vpop.trf.xlu0
        %v537 = vpop.trf.xlu0
        %v538 = vpop.trf.xlu0
        %v539 = vpop.trf.xlu0
        %v540 = vpop.trf.xlu0
        %v541 = vpop.trf.xlu0
        %v542 = vpop.trf.xlu0
        %v543 = vpop.trf.xlu0
        %v544 = vpop.trf.xlu0
        %v545 = vpop.trf.xlu0
        %v546 = vpop.trf.xlu0
        %v547 = vpop.trf.xlu0
        %v548 = vpop.trf.xlu0
        %v549 = vpop.trf.xlu0
        %v550 = vpop.trf.xlu0
        %v551 = vpop.trf.xlu0
        %v552 = vld [vmem:[#allocation5] sm:$0xff]
        %v553 = vld [vmem:[#allocation5 + $0x8] sm:$0xff]
        %v554 = vld [vmem:[#allocation5 + $0x10] sm:$0xff]
        %v555 = vld [vmem:[#allocation5 + $0x18] sm:$0xff]
        %v556 = vld [vmem:[#allocation5 + $0x20] sm:$0xff]
        %v557 = vld [vmem:[#allocation5 + $0x28] sm:$0xff]
        %v558 = vld [vmem:[#allocation5 + $0x30] sm:$0xff]
        %v559 = vld [vmem:[#allocation5 + $0x38] sm:$0xff]
        %v560 = vld [vmem:[#allocation5 + $0x40] sm:$0xff]
        %v561 = vld [vmem:[#allocation5 + $0x48] sm:$0xff]
        %v562 = vld [vmem:[#allocation5 + $0x50] sm:$0xff]
        %v563 = vld [vmem:[#allocation5 + $0x58] sm:$0xff]
        %v564 = vld [vmem:[#allocation5 + $0x60] sm:$0xff]
        %v565 = vld [vmem:[#allocation5 + $0x68] sm:$0xff]
        %v566 = vld [vmem:[#allocation5 + $0x70] sm:$0xff]
        %v567 = vld [vmem:[#allocation5 + $0x78] sm:$0xff]
        %568 = vmatprep.subr.mxu0 0.0
        %569 = vmatpush1.msra.mxu0 %v552
        %570 = vmatprep.subr.mxu0 0.0
        %571 = vmatpush1.msra.mxu0 %v553
        %572 = vmatprep.subr.mxu0 0.0
        %573 = vmatpush1.msra.mxu0 %v554
        %574 = vmatprep.subr.mxu0 0.0
        %575 = vmatpush1.msra.mxu0 %v555
        %576 = vmatprep.subr.mxu0 0.0
        %577 = vmatpush1.msra.mxu0 %v556
        %578 = vmatprep.subr.mxu0 0.0
        %579 = vmatpush1.msra.mxu0 %v557
        %580 = vmatprep.subr.mxu0 0.0
        %581 = vmatpush1.msra.mxu0 %v558
        %582 = vmatprep.subr.mxu0 0.0
        %583 = vmatpush1.msra.mxu0 %v559
        %584 = vmatprep.subr.mxu0 0.0
        %585 = vmatpush1.msra.mxu0 %v560
        %586 = vmatprep.subr.mxu0 0.0
        %587 = vmatpush1.msra.mxu0 %v561
        %588 = vmatprep.subr.mxu0 0.0
        %589 = vmatpush1.msra.mxu0 %v562
        %590 = vmatprep.subr.mxu0 0.0
        %591 = vmatpush1.msra.mxu0 %v563
        %592 = vmatprep.subr.mxu0 0.0
        %593 = vmatpush1.msra.mxu0 %v564
        %594 = vmatprep.subr.mxu0 0.0
        %595 = vmatpush1.msra.mxu0 %v565
        %596 = vmatprep.subr.mxu0 0.0
        %597 = vmatpush1.msra.mxu0 %v566
        %598 = vmatprep.subr.mxu0 0.0
        %599 = vmatpush1.msra.mxu0 %v567
        %600 = vmatprep.subr.mxu0 0.0
        %601 = vmatpush1.msra.mxu0 0.0
        %602 = vmatprep.subr.mxu0 0.0
        %603 = vmatpush1.msra.mxu0 0.0
        %604 = vmatprep.subr.mxu0 0.0
        %605 = vmatpush1.msra.mxu0 0.0
        %606 = vmatprep.subr.mxu0 0.0
        %607 = vmatpush1.msra.mxu0 0.0
        %608 = vmatprep.subr.mxu0 0.0
        %609 = vmatpush1.msra.mxu0 0.0
        %610 = vmatprep.subr.mxu0 0.0
        %611 = vmatpush1.msra.mxu0 0.0
        %612 = vmatprep.subr.mxu0 0.0
        %613 = vmatpush1.msra.mxu0 0.0
        %614 = vmatprep.subr.mxu0 0.0
        %615 = vmatpush1.msra.mxu0 0.0
        %616 = vmatprep.subr.mxu0 0.0
        %617 = vmatpush1.msra.mxu0 0.0
        %618 = vmatprep.subr.mxu0 0.0
        %619 = vmatpush1.msra.mxu0 0.0
        %620 = vmatprep.subr.mxu0 0.0
        %621 = vmatpush1.msra.mxu0 0.0
        %622 = vmatprep.subr.mxu0 0.0
        %623 = vmatpush1.msra.mxu0 0.0
        %624 = vmatprep.subr.mxu0 0.0
        %625 = vmatpush1.msra.mxu0 0.0
        %626 = vmatprep.subr.mxu0 0.0
        %627 = vmatpush1.msra.mxu0 0.0
        %628 = vmatprep.subr.mxu0 0.0
        %629 = vmatpush1.msra.mxu0 0.0
        %630 = vmatprep.subr.mxu0 0.0
        %631 = vmatpush1.msra.mxu0 0.0
        %632 = vmatprep.mubr.f32.mxu0 0.0
        %633 = vmatmul.mubr.f32.gmra.mrb[0].mxu0 %v440
        %v634 = vpop.f32.mrb[0].mxu0
        %v635 = vadd.f32 0.0, %v634
        %v636 = vpop.f32.mrb[0].mxu0
        %637 = vmatprep.mubr.f32.mxu0 0.0
        %638 = vmatmul.mubr.f32.gmra.mrb[0].mxu0 %v441
        %v639 = vpop.f32.mrb[0].mxu0
        %v640 = vadd.f32 0.0, %v639
        %v641 = vpop.f32.mrb[0].mxu0
        %642 = vmatprep.mubr.f32.mxu0 0.0
        %643 = vmatmul.mubr.f32.gmra.mrb[0].mxu0 %v442
        %v644 = vpop.f32.mrb[0].mxu0
        %v645 = vadd.f32 0.0, %v644
        %v646 = vpop.f32.mrb[0].mxu0
        %647 = vmatprep.mubr.f32.mxu0 0.0
        %648 = vmatmul.mubr.f32.gmra.mrb[0].mxu0 %v443
        %v649 = vpop.f32.mrb[0].mxu0
        %v650 = vadd.f32 0.0, %v649
        %v651 = vpop.f32.mrb[0].mxu0
        %652 = vmatprep.mubr.f32.mxu0 0.0
        %653 = vmatmul.mubr.f32.gmra.mrb[0].mxu0 %v444
        %v654 = vpop.f32.mrb[0].mxu0
        %v655 = vadd.f32 0.0, %v654
        %v656 = vpop.f32.mrb[0].mxu0
        %657 = vmatprep.mubr.f32.mxu0 0.0
        %658 = vmatmul.mubr.f32.gmra.mrb[0].mxu0 %v445
        %v659 = vpop.f32.mrb[0].mxu0
        %v660 = vadd.f32 0.0, %v659
        %v661 = vpop.f32.mrb[0].mxu0
        %662 = vmatprep.mubr.f32.mxu0 0.0
        %663 = vmatmul.mubr.f32.gmra.mrb[0].mxu0 %v446
        %v664 = vpop.f32.mrb[0].mxu0
        %v665 = vadd.f32 0.0, %v664
        %v666 = vpop.f32.mrb[0].mxu0
        %667 = vmatprep.mubr.f32.mxu0 0.0
        %668 = vmatmul.mubr.f32.gmra.mrb[0].mxu0 %v447
        %v669 = vpop.f32.mrb[0].mxu0
        %v670 = vadd.f32 0.0, %v669
        %v671 = vpop.f32.mrb[0].mxu0
        %672 = vmatprep.mubr.f32.mxu0 0.0
        %673 = vmatmul.mubr.f32.gmra.mrb[0].mxu0 %v448
        %v674 = vpop.f32.mrb[0].mxu0
        %v675 = vadd.f32 0.0, %v674
        %v676 = vpop.f32.mrb[0].mxu0
        %677 = vmatprep.mubr.f32.mxu0 0.0
        %678 = vmatmul.mubr.f32.gmra.mrb[0].mxu0 %v449
        %v679 = vpop.f32.mrb[0].mxu0
        %v680 = vadd.f32 0.0, %v679
        %v681 = vpop.f32.mrb[0].mxu0
        %682 = vmatprep.mubr.f32.mxu0 0.0
        %683 = vmatmul.mubr.f32.gmra.mrb[0].mxu0 %v450
        %v684 = vpop.f32.mrb[0].mxu0
        %v685 = vadd.f32 0.0, %v684
        %v686 = vpop.f32.mrb[0].mxu0
        %687 = vmatprep.mubr.f32.mxu0 0.0
        %688 = vmatmul.mubr.f32.gmra.mrb[0].mxu0 %v451
        %v689 = vpop.f32.mrb[0].mxu0
        %v690 = vadd.f32 0.0, %v689
        %v691 = vpop.f32.mrb[0].mxu0
        %692 = vmatprep.mubr.f32.mxu0 0.0
        %693 = vmatmul.mubr.f32.gmra.mrb[0].mxu0 %v452
        %v694 = vpop.f32.mrb[0].mxu0
        %v695 = vadd.f32 0.0, %v694
        %v696 = vpop.f32.mrb[0].mxu0
        %697 = vmatprep.mubr.f32.mxu0 0.0
        %698 = vmatmul.mubr.f32.gmra.mrb[0].mxu0 %v453
        %v699 = vpop.f32.mrb[0].mxu0
        %v700 = vadd.f32 0.0, %v699
        %v701 = vpop.f32.mrb[0].mxu0
        %702 = vmatprep.mubr.f32.mxu0 0.0
        %703 = vmatmul.mubr.f32.gmra.mrb[0].mxu0 %v454
        %v704 = vpop.f32.mrb[0].mxu0
        %v705 = vadd.f32 0.0, %v704
        %v706 = vpop.f32.mrb[0].mxu0
        %707 = vmatprep.mubr.f32.mxu0 0.0
        %708 = vmatmul.mubr.f32.gmra.mrb[0].mxu0 %v455
        %v709 = vpop.f32.mrb[0].mxu0
        %v710 = vadd.f32 0.0, %v709
        %v711 = vpop.f32.mrb[0].mxu0
        %712 = vmatprep.mubr.f32.mxu0 0.0
        %713 = vmatmul.mubr.f32.gmra.mrb[0].mxu0 %v472
        %v714 = vpop.f32.mrb[0].mxu0
        %v715 = vadd.f32 0.0, %v714
        %v716 = vpop.f32.mrb[0].mxu0
        %717 = vmatprep.mubr.f32.mxu0 0.0
        %718 = vmatmul.mubr.f32.gmra.mrb[0].mxu0 %v473
        %v719 = vpop.f32.mrb[0].mxu0
        %v720 = vadd.f32 0.0, %v719
        %v721 = vpop.f32.mrb[0].mxu0
        %722 = vmatprep.mubr.f32.mxu0 0.0
        %723 = vmatmul.mubr.f32.gmra.mrb[0].mxu0 %v474
        %v724 = vpop.f32.mrb[0].mxu0
        %v725 = vadd.f32 0.0, %v724
        %v726 = vpop.f32.mrb[0].mxu0
        %727 = vmatprep.mubr.f32.mxu0 0.0
        %728 = vmatmul.mubr.f32.gmra.mrb[0].mxu0 %v475
        %v729 = vpop.f32.mrb[0].mxu0
        %v730 = vadd.f32 0.0, %v729
        %v731 = vpop.f32.mrb[0].mxu0
        %732 = vmatprep.mubr.f32.mxu0 0.0
        %733 = vmatmul.mubr.f32.gmra.mrb[0].mxu0 %v476
        %v734 = vpop.f32.mrb[0].mxu0
        %v735 = vadd.f32 0.0, %v734
        %v736 = vpop.f32.mrb[0].mxu0
        %737 = vmatprep.mubr.f32.mxu0 0.0
        %738 = vmatmul.mubr.f32.gmra.mrb[0].mxu0 %v477
        %v739 = vpop.f32.mrb[0].mxu0
        %v740 = vadd.f32 0.0, %v739
        %v741 = vpop.f32.mrb[0].mxu0
        %742 = vmatprep.mubr.f32.mxu0 0.0
        %743 = vmatmul.mubr.f32.gmra.mrb[0].mxu0 %v478
        %v744 = vpop.f32.mrb[0].mxu0
        %v745 = vadd.f32 0.0, %v744
        %v746 = vpop.f32.mrb[0].mxu0
        %747 = vmatprep.mubr.f32.mxu0 0.0
        %748 = vmatmul.mubr.f32.gmra.mrb[0].mxu0 %v479
        %v749 = vpop.f32.mrb[0].mxu0
        %v750 = vadd.f32 0.0, %v749
        %v751 = vpop.f32.mrb[0].mxu0
        %752 = vmatprep.mubr.f32.mxu0 0.0
        %753 = vmatmul.mubr.f32.gmra.mrb[0].mxu0 %v480
        %v754 = vpop.f32.mrb[0].mxu0
        %v755 = vadd.f32 0.0, %v754
        %v756 = vpop.f32.mrb[0].mxu0
        %757 = vmatprep.mubr.f32.mxu0 0.0
        %758 = vmatmul.mubr.f32.gmra.mrb[0].mxu0 %v481
        %v759 = vpop.f32.mrb[0].mxu0
        %v760 = vadd.f32 0.0, %v759
        %v761 = vpop.f32.mrb[0].mxu0
        %762 = vmatprep.mubr.f32.mxu0 0.0
        %763 = vmatmul.mubr.f32.gmra.mrb[0].mxu0 %v482
        %v764 = vpop.f32.mrb[0].mxu0
        %v765 = vadd.f32 0.0, %v764
        %v766 = vpop.f32.mrb[0].mxu0
        %767 = vmatprep.mubr.f32.mxu0 0.0
        %768 = vmatmul.mubr.f32.gmra.mrb[0].mxu0 %v483
        %v769 = vpop.f32.mrb[0].mxu0
        %v770 = vadd.f32 0.0, %v769
        %v771 = vpop.f32.mrb[0].mxu0
        %772 = vmatprep.mubr.f32.mxu0 0.0
        %773 = vmatmul.mubr.f32.gmra.mrb[0].mxu0 %v484
        %v774 = vpop.f32.mrb[0].mxu0
        %v775 = vadd.f32 0.0, %v774
        %v776 = vpop.f32.mrb[0].mxu0
        %777 = vmatprep.mubr.f32.mxu0 0.0
        %778 = vmatmul.mubr.f32.gmra.mrb[0].mxu0 %v485
        %v779 = vpop.f32.mrb[0].mxu0
        %v780 = vadd.f32 0.0, %v779
        %v781 = vpop.f32.mrb[0].mxu0
        %782 = vmatprep.mubr.f32.mxu0 0.0
        %783 = vmatmul.mubr.f32.gmra.mrb[0].mxu0 %v486
        %v784 = vpop.f32.mrb[0].mxu0
        %v785 = vadd.f32 0.0, %v784
        %v786 = vpop.f32.mrb[0].mxu0
        %787 = vmatprep.mubr.f32.mxu0 0.0
        %788 = vmatmul.mubr.f32.gmra.mrb[0].mxu0 %v487
        %v789 = vpop.f32.mrb[0].mxu0
        %v790 = vadd.f32 0.0, %v789
        %v791 = vpop.f32.mrb[0].mxu0
        %792 = vmatprep.mubr.f32.mxu0 0.0
        %793 = vmatmul.mubr.f32.gmra.mrb[0].mxu0 %v504
        %v794 = vpop.f32.mrb[0].mxu0
        %v795 = vadd.f32 0.0, %v794
        %v796 = vpop.f32.mrb[0].mxu0
        %797 = vmatprep.mubr.f32.mxu0 0.0
        %798 = vmatmul.mubr.f32.gmra.mrb[0].mxu0 %v505
        %v799 = vpop.f32.mrb[0].mxu0
        %v800 = vadd.f32 0.0, %v799
        %v801 = vpop.f32.mrb[0].mxu0
        %802 = vmatprep.mubr.f32.mxu0 0.0
        %803 = vmatmul.mubr.f32.gmra.mrb[0].mxu0 %v506
        %v804 = vpop.f32.mrb[0].mxu0
        %v805 = vadd.f32 0.0, %v804
        %v806 = vpop.f32.mrb[0].mxu0
        %807 = vmatprep.mubr.f32.mxu0 0.0
        %808 = vmatmul.mubr.f32.gmra.mrb[0].mxu0 %v507
        %v809 = vpop.f32.mrb[0].mxu0
        %v810 = vadd.f32 0.0, %v809
        %v811 = vpop.f32.mrb[0].mxu0
        %812 = vmatprep.mubr.f32.mxu0 0.0
        %813 = vmatmul.mubr.f32.gmra.mrb[0].mxu0 %v508
        %v814 = vpop.f32.mrb[0].mxu0
        %v815 = vadd.f32 0.0, %v814
        %v816 = vpop.f32.mrb[0].mxu0
        %817 = vmatprep.mubr.f32.mxu0 0.0
        %818 = vmatmul.mubr.f32.gmra.mrb[0].mxu0 %v509
        %v819 = vpop.f32.mrb[0].mxu0
        %v820 = vadd.f32 0.0, %v819
        %v821 = vpop.f32.mrb[0].mxu0
        %822 = vmatprep.mubr.f32.mxu0 0.0
        %823 = vmatmul.mubr.f32.gmra.mrb[0].mxu0 %v510
        %v824 = vpop.f32.mrb[0].mxu0
        %v825 = vadd.f32 0.0, %v824
        %v826 = vpop.f32.mrb[0].mxu0
        %827 = vmatprep.mubr.f32.mxu0 0.0
        %828 = vmatmul.mubr.f32.gmra.mrb[0].mxu0 %v511
        %v829 = vpop.f32.mrb[0].mxu0
        %v830 = vadd.f32 0.0, %v829
        %v831 = vpop.f32.mrb[0].mxu0
        %832 = vmatprep.mubr.f32.mxu0 0.0
        %833 = vmatmul.mubr.f32.gmra.mrb[0].mxu0 %v512
        %v834 = vpop.f32.mrb[0].mxu0
        %v835 = vadd.f32 0.0, %v834
        %v836 = vpop.f32.mrb[0].mxu0
        %837 = vmatprep.mubr.f32.mxu0 0.0
        %838 = vmatmul.mubr.f32.gmra.mrb[0].mxu0 %v513
        %v839 = vpop.f32.mrb[0].mxu0
        %v840 = vadd.f32 0.0, %v839
        %v841 = vpop.f32.mrb[0].mxu0
        %842 = vmatprep.mubr.f32.mxu0 0.0
        %843 = vmatmul.mubr.f32.gmra.mrb[0].mxu0 %v514
        %v844 = vpop.f32.mrb[0].mxu0
        %v845 = vadd.f32 0.0, %v844
        %v846 = vpop.f32.mrb[0].mxu0
        %847 = vmatprep.mubr.f32.mxu0 0.0
        %848 = vmatmul.mubr.f32.gmra.mrb[0].mxu0 %v515
        %v849 = vpop.f32.mrb[0].mxu0
        %v850 = vadd.f32 0.0, %v849
        %v851 = vpop.f32.mrb[0].mxu0
        %852 = vmatprep.mubr.f32.mxu0 0.0
        %853 = vmatmul.mubr.f32.gmra.mrb[0].mxu0 %v516
        %v854 = vpop.f32.mrb[0].mxu0
        %v855 = vadd.f32 0.0, %v854
        %v856 = vpop.f32.mrb[0].mxu0
        %857 = vmatprep.mubr.f32.mxu0 0.0
        %858 = vmatmul.mubr.f32.gmra.mrb[0].mxu0 %v517
        %v859 = vpop.f32.mrb[0].mxu0
        %v860 = vadd.f32 0.0, %v859
        %v861 = vpop.f32.mrb[0].mxu0
        %862 = vmatprep.mubr.f32.mxu0 0.0
        %863 = vmatmul.mubr.f32.gmra.mrb[0].mxu0 %v518
        %v864 = vpop.f32.mrb[0].mxu0
        %v865 = vadd.f32 0.0, %v864
        %v866 = vpop.f32.mrb[0].mxu0
        %867 = vmatprep.mubr.f32.mxu0 0.0
        %868 = vmatmul.mubr.f32.gmra.mrb[0].mxu0 %v519
        %v869 = vpop.f32.mrb[0].mxu0
        %v870 = vadd.f32 0.0, %v869
        %v871 = vpop.f32.mrb[0].mxu0
        %872 = vmatprep.mubr.f32.mxu0 0.0
        %873 = vmatmul.mubr.f32.gmra.mrb[0].mxu0 %v536
        %v874 = vpop.f32.mrb[0].mxu0
        %v875 = vadd.f32 0.0, %v874
        %v876 = vpop.f32.mrb[0].mxu0
        %877 = vmatprep.mubr.f32.mxu0 0.0
        %878 = vmatmul.mubr.f32.gmra.mrb[0].mxu0 %v537
        %v879 = vpop.f32.mrb[0].mxu0
        %v880 = vadd.f32 0.0, %v879
        %v881 = vpop.f32.mrb[0].mxu0
        %882 = vmatprep.mubr.f32.mxu0 0.0
        %883 = vmatmul.mubr.f32.gmra.mrb[0].mxu0 %v538
        %v884 = vpop.f32.mrb[0].mxu0
        %v885 = vadd.f32 0.0, %v884
        %v886 = vpop.f32.mrb[0].mxu0
        %887 = vmatprep.mubr.f32.mxu0 0.0
        %888 = vmatmul.mubr.f32.gmra.mrb[0].mxu0 %v539
        %v889 = vpop.f32.mrb[0].mxu0
        %v890 = vadd.f32 0.0, %v889
        %v891 = vpop.f32.mrb[0].mxu0
        %892 = vmatprep.mubr.f32.mxu0 0.0
        %893 = vmatmul.mubr.f32.gmra.mrb[0].mxu0 %v540
        %v894 = vpop.f32.mrb[0].mxu0
        %v895 = vadd.f32 0.0, %v894
        %v896 = vpop.f32.mrb[0].mxu0
        %897 = vmatprep.mubr.f32.mxu0 0.0
        %898 = vmatmul.mubr.f32.gmra.mrb[0].mxu0 %v541
        %v899 = vpop.f32.mrb[0].mxu0
        %v900 = vadd.f32 0.0, %v899
        %v901 = vpop.f32.mrb[0].mxu0
        %902 = vmatprep.mubr.f32.mxu0 0.0
        %903 = vmatmul.mubr.f32.gmra.mrb[0].mxu0 %v542
        %v904 = vpop.f32.mrb[0].mxu0
        %v905 = vadd.f32 0.0, %v904
        %v906 = vpop.f32.mrb[0].mxu0
        %907 = vmatprep.mubr.f32.mxu0 0.0
        %908 = vmatmul.mubr.f32.gmra.mrb[0].mxu0 %v543
        %v909 = vpop.f32.mrb[0].mxu0
        %v910 = vadd.f32 0.0, %v909
        %v911 = vpop.f32.mrb[0].mxu0
        %912 = vmatprep.mubr.f32.mxu0 0.0
        %913 = vmatmul.mubr.f32.gmra.mrb[0].mxu0 %v544
        %v914 = vpop.f32.mrb[0].mxu0
        %v915 = vadd.f32 0.0, %v914
        %v916 = vpop.f32.mrb[0].mxu0
        %917 = vmatprep.mubr.f32.mxu0 0.0
        %918 = vmatmul.mubr.f32.gmra.mrb[0].mxu0 %v545
        %v919 = vpop.f32.mrb[0].mxu0
        %v920 = vadd.f32 0.0, %v919
        %v921 = vpop.f32.mrb[0].mxu0
        %922 = vmatprep.mubr.f32.mxu0 0.0
        %923 = vmatmul.mubr.f32.gmra.mrb[0].mxu0 %v546
        %v924 = vpop.f32.mrb[0].mxu0
        %v925 = vadd.f32 0.0, %v924
        %v926 = vpop.f32.mrb[0].mxu0
        %927 = vmatprep.mubr.f32.mxu0 0.0
        %928 = vmatmul.mubr.f32.gmra.mrb[0].mxu0 %v547
        %v929 = vpop.f32.mrb[0].mxu0
        %v930 = vadd.f32 0.0, %v929
        %v931 = vpop.f32.mrb[0].mxu0
        %932 = vmatprep.mubr.f32.mxu0 0.0
        %933 = vmatmul.mubr.f32.gmra.mrb[0].mxu0 %v548
        %v934 = vpop.f32.mrb[0].mxu0
        %v935 = vadd.f32 0.0, %v934
        %v936 = vpop.f32.mrb[0].mxu0
        %937 = vmatprep.mubr.f32.mxu0 0.0
        %938 = vmatmul.mubr.f32.gmra.mrb[0].mxu0 %v549
        %v939 = vpop.f32.mrb[0].mxu0
        %v940 = vadd.f32 0.0, %v939
        %v941 = vpop.f32.mrb[0].mxu0
        %942 = vmatprep.mubr.f32.mxu0 0.0
        %943 = vmatmul.mubr.f32.gmra.mrb[0].mxu0 %v550
        %v944 = vpop.f32.mrb[0].mxu0
        %v945 = vadd.f32 0.0, %v944
        %v946 = vpop.f32.mrb[0].mxu0
        %947 = vmatprep.mubr.f32.mxu0 0.0
        %948 = vmatmul.mubr.f32.gmra.mrb[0].mxu0 %v551
        %v949 = vpop.f32.mrb[0].mxu0
        %v950 = vadd.f32 0.0, %v949
        %v951 = vpop.f32.mrb[0].mxu0
        %952 = vdwg.mxu0
        %953 = vst [vmem:[%s192] sm:$0xff] %v635
        %954 = vst [vmem:[%s192 + $0x8] sm:$0xff] %v640
        %955 = vst [vmem:[%s192 + $0x10] sm:$0xff] %v645
        %956 = vst [vmem:[%s192 + $0x18] sm:$0xff] %v650
        %957 = vst [vmem:[%s192 + $0x20] sm:$0xff] %v655
        %958 = vst [vmem:[%s192 + $0x28] sm:$0xff] %v660
        %959 = vst [vmem:[%s192 + $0x30] sm:$0xff] %v665
        %960 = vst [vmem:[%s192 + $0x38] sm:$0xff] %v670
        %961 = vst [vmem:[%s192 + $0x40] sm:$0xff] %v675
        %962 = vst [vmem:[%s192 + $0x48] sm:$0xff] %v680
        %963 = vst [vmem:[%s192 + $0x50] sm:$0xff] %v685
        %964 = vst [vmem:[%s192 + $0x58] sm:$0xff] %v690
        %965 = vst [vmem:[%s192 + $0x60] sm:$0xff] %v695
        %966 = vst [vmem:[%s192 + $0x68] sm:$0xff] %v700
        %967 = vst [vmem:[%s192 + $0x70] sm:$0xff] %v705
        %968 = vst [vmem:[%s192 + $0x78] sm:$0xff] %v710
        %969 = vst [vmem:[%s192 + $0x80] sm:$0xff] %v715
        %970 = vst [vmem:[%s192 + $0x88] sm:$0xff] %v720
        %971 = vst [vmem:[%s192 + $0x90] sm:$0xff] %v725
        %972 = vst [vmem:[%s192 + $0x98] sm:$0xff] %v730
        %973 = vst [vmem:[%s192 + $0xa0] sm:$0xff] %v735
        %974 = vst [vmem:[%s192 + $0xa8] sm:$0xff] %v740
        %975 = vst [vmem:[%s192 + $0xb0] sm:$0xff] %v745
        %976 = vst [vmem:[%s192 + $0xb8] sm:$0xff] %v750
        %977 = vst [vmem:[%s192 + $0xc0] sm:$0xff] %v755
        %978 = vst [vmem:[%s192 + $0xc8] sm:$0xff] %v760
        %979 = vst [vmem:[%s192 + $0xd0] sm:$0xff] %v765
        %980 = vst [vmem:[%s192 + $0xd8] sm:$0xff] %v770
        %981 = vst [vmem:[%s192 + $0xe0] sm:$0xff] %v775
        %982 = vst [vmem:[%s192 + $0xe8] sm:$0xff] %v780
        %983 = vst [vmem:[%s192 + $0xf0] sm:$0xff] %v785
        %984 = vst [vmem:[%s192 + $0xf8] sm:$0xff] %v790
        %985 = vst [vmem:[%s192 + $0x100] sm:$0xff] %v795
        %986 = vst [vmem:[%s192 + $0x108] sm:$0xff] %v800
        %987 = vst [vmem:[%s192 + $0x110] sm:$0xff] %v805
        %988 = vst [vmem:[%s192 + $0x118] sm:$0xff] %v810
        %989 = vst [vmem:[%s192 + $0x120] sm:$0xff] %v815
        %990 = vst [vmem:[%s192 + $0x128] sm:$0xff] %v820
        %991 = vst [vmem:[%s192 + $0x130] sm:$0xff] %v825
        %992 = vst [vmem:[%s192 + $0x138] sm:$0xff] %v830
        %993 = vst [vmem:[%s192 + $0x140] sm:$0xff] %v835
        %994 = vst [vmem:[%s192 + $0x148] sm:$0xff] %v840
        %995 = vst [vmem:[%s192 + $0x150] sm:$0xff] %v845
        %996 = vst [vmem:[%s192 + $0x158] sm:$0xff] %v850
        %997 = vst [vmem:[%s192 + $0x160] sm:$0xff] %v855
        %998 = vst [vmem:[%s192 + $0x168] sm:$0xff] %v860
        %999 = vst [vmem:[%s192 + $0x170] sm:$0xff] %v865
        %1000 = vst [vmem:[%s192 + $0x178] sm:$0xff] %v870
        %1001 = vst [vmem:[%s192 + $0x180] sm:$0xff] %v875
        %1002 = vst [vmem:[%s192 + $0x188] sm:$0xff] %v880
        %1003 = vst [vmem:[%s192 + $0x190] sm:$0xff] %v885
        %1004 = vst [vmem:[%s192 + $0x198] sm:$0xff] %v890
        %1005 = vst [vmem:[%s192 + $0x1a0] sm:$0xff] %v895
        %1006 = vst [vmem:[%s192 + $0x1a8] sm:$0xff] %v900
        %1007 = vst [vmem:[%s192 + $0x1b0] sm:$0xff] %v905
        %1008 = vst [vmem:[%s192 + $0x1b8] sm:$0xff] %v910
        %1009 = vst [vmem:[%s192 + $0x1c0] sm:$0xff] %v915
        %1010 = vst [vmem:[%s192 + $0x1c8] sm:$0xff] %v920
        %1011 = vst [vmem:[%s192 + $0x1d0] sm:$0xff] %v925
        %1012 = vst [vmem:[%s192 + $0x1d8] sm:$0xff] %v930
        %1013 = vst [vmem:[%s192 + $0x1e0] sm:$0xff] %v935
        %1014 = vst [vmem:[%s192 + $0x1e8] sm:$0xff] %v940
        %1015 = vst [vmem:[%s192 + $0x1f0] sm:$0xff] %v945
        %1016 = vst [vmem:[%s192 + $0x1f8] sm:$0xff] %v950
        %s1017 = sand.u32 %s91, 1
        %s1018 = scalar_lea.sflag [#allocation4], %s1017
        %s1019 = sand.u32 %s91, 1
        %s1020 = smul.addr %s1019, 512
        %s1021 = scalar_lea.vmem [#allocation7], %s1020
        // Predicated region
        $region37: #{tpu_custom_call.1} parent=27 // pred_check
          %p1022 = pneg %p101
        $region38: #{tpu_custom_call.1} parent=27 // pred_check_branch
          %1024 = sbr.rel (%p1022) target = $region40
        $region39: #{tpu_custom_call.1} parent=27 // pred_region
          %s1025 = smul.u32 64, %s25
          %s1027 = ssub.s32 8192, 8192
          %1028 = vsyncadd %s1018, %s1027
          %s1029 = smul.addr %s24, 64
          %s1030 = sadd.s32 %s1025, %s1029
          %s1031 = smul.addr %s1030, 128
          %s1032 = scalar_lea.hbm %s2, %s1031
          %s1033 = sshll.u32 %s1021, 4
          %s1034 = int_to_ptr.vmem [resolvable:$true] %s1033
          %1039 = dma.vmem_to_hbm [thread:$0]  %s1034, 8192, %s1032, %s1018, 128, 128, 8
        $region40: #{tpu_custom_call.1} parent=27 // pred_fallthru
          _
      $region28: #{tpu_custom_call.1} parent=5 // pred_fallthru
        _
      %p1040 = scmp.le.s32.totalorder 2, %s15
      // Predicated region
      $region41: #{tpu_custom_call.1} parent=5 // pred_check
        %p1041 = pneg %p1040
      $region42: #{tpu_custom_call.1} parent=5 // pred_check_branch
        %1043 = sbr.rel (%p1041) target = $region44
      $region43: #{tpu_custom_call.1} parent=5 // pred_region
        %s1044 = ssub.s32 %s15, 2
        // Predicated region
        $region45: #{tpu_custom_call.1} parent=43 // pred_check
          %p1045 = pneg %p107
        $region46: #{tpu_custom_call.1} parent=43 // pred_check_branch
          %1047 = sbr.rel (%p1045) target = $region48
        $region47: #{tpu_custom_call.1} parent=43 // pred_region
          %s1048 = sand.u32 %s92, 1
          %s1049 = scalar_lea.sflag [#allocation4], %s1048
          %s1050 = sand.u32 %s92, 1
          %s1051 = smul.addr %s1050, 512
          %s1052 = scalar_lea.vmem [#allocation7], %s1051
          %1053 = dma.done %s1049, 8192
        $region48: #{tpu_custom_call.1} parent=43 // pred_fallthru
          _
      $region44: #{tpu_custom_call.1} parent=5 // pred_fallthru
        _
    $region6: #{tpu_custom_call.1} parent=1 // loop_footer
      %s19 = sadd.s32 1, %s15
    $region7: #{tpu_custom_call.1} parent=1 // loop_footer_branch
      %14 = sbr.rel target = $region3
    $region8: #{tpu_custom_call.1} parent=1 // loop_exit
      _
    %1054 = vsyncpa [#allocation3], 1
    %s1055 = scalar_lea.sflag [#allocation3], 1
    %1056 = vsyncpa %s1055, 1
    %1057 = vsyncpa [#allocation6], 1
    %1058 = vsyncpa [#allocation4], 1
    %s1059 = scalar_lea.sflag [#allocation4], 1
    %1060 = vsyncpa %s1059, 1

</llo_original>
